<compile_context>
chip_gen: v5e
topology: v5e:2x2
jax: 0.10.0
libtpu: 0.0.40
codegen_flags: <defaults>
</compile_context>

<pallas_src>
import numpy as np

import jax
import jax.numpy as jnp
from jax import lax
from jax.experimental import pallas as pl
from jax.experimental.pallas import tpu as pltpu


def cbam_kernel(x_ref, w1_ref, b1_ref, w2_ref, b2_ref, cm_ref, o_ref):
    x = x_ref[...].astype(jnp.float32)            # (nb, C, HW), lane-dense
    nb, C, HW = x.shape

    # ---------------- Channel attention (fused MLP over avg & max pools) ----
    avg_c = jnp.mean(x, axis=2)                   # (nb, C)
    max_c = jnp.max(x, axis=2)                    # (nb, C)
    pooled = jnp.concatenate([avg_c, max_c], axis=0)   # (2*nb, C)

    w1 = w1_ref[...].astype(jnp.float32)          # (C, hidden)
    b1 = b1_ref[...].astype(jnp.float32)          # (1, hidden)
    w2 = w2_ref[...].astype(jnp.float32)          # (hidden, C)
    b2 = b2_ref[...].astype(jnp.float32)          # (1, C)

    h = jnp.dot(pooled, w1, preferred_element_type=jnp.float32) + b1
    h = jnp.maximum(h, 0.0)                       # ReLU
    mlp_out = jnp.dot(h, w2, preferred_element_type=jnp.float32) + b2   # (2*nb, C)

    ca = jax.nn.sigmoid(mlp_out[:nb] + mlp_out[nb:])   # (nb, C)
    x1 = x * ca[:, :, None]                       # (nb, C, HW) channel-attended

    # ---------------- Spatial attention (7x7 conv as one MXU matmul) --------
    avg_s = jnp.mean(x1, axis=1)                  # (nb, HW)
    max_s = jnp.max(x1, axis=1)                   # (nb, HW)
    maps = jnp.concatenate([avg_s, max_s], axis=1)        # (nb, 2*HW)

    # convmat[c*HW + p, q] = wc[c, di, dj] for p = in-bounds neighbor of q,
    # zero for padded taps, so this single matmul == Conv2d(2,1,7,pad=3).
    acc = jnp.dot(maps, cm_ref[...].astype(jnp.float32),
                  preferred_element_type=jnp.float32)      # (nb, HW)

    sa = jax.nn.sigmoid(acc)                      # (nb, HW)
    o_ref[...] = (x1 * sa[:, None, :]).astype(o_ref.dtype)


def _build_conv_matrix(wc, H, W, dtype=jnp.float32):
    """Dense (2*HW, HW) matrix implementing Conv2d(2, 1, k=7, pad=3, bias=False)
    on the flattened (H*W,) spatial maps.  Border (zero-pad) masks are baked in.
    Built on host with numpy; weights-only, so this is trace-time work."""
    HW = H * W
    wc_np = np.asarray(wc, dtype=np.float32)      # (2, 7, 7)
    q = np.arange(HW)
    rq, cq = q // W, q % W
    M = np.zeros((2, HW, HW), dtype=np.float32)
    for di in range(7):
        for dj in range(7):
            ri = rq + di - 3
            cj = cq + dj - 3
            valid = (ri >= 0) & (ri < H) & (cj >= 0) & (cj < W)
            p = ri[valid] * W + cj[valid]
            qv = q[valid]
            for c in range(2):                    # (p, q) pairs unique per tap
                M[c, p, qv] += wc_np[c, di, dj]
    return jnp.asarray(M.reshape(2 * HW, HW), dtype)


def _pick_block_batch(N, C, HW, itemsize, vmem_budget_bytes=8 * 1024 * 1024,
                      min_split_block_elems=1 << 18):
    """Batch elements per grid step.

    * Cap is derived from the VMEM budget (~6 resident block copies: in/out
      double buffers + the x1 temp), up to 32 — far below every generation's
      scoped VMEM at these sizes.
    * Prefer >= 2 grid steps (so v7x's 2 TensorCores can split the 'parallel'
      batch axis) only when a half-size block still carries enough work
      (>= min_split_block_elems elements) to amortize the ~0.35 us/step
      overhead; otherwise take one big block (best on v5e/v6e and for tiny N).
    """
    cap = max(1, vmem_budget_bytes // max(1, 6 * C * HW * itemsize))
    cap = min(cap, N, 32)
    divisors = [nb for nb in range(1, cap + 1) if N % nb == 0]
    best = divisors[-1]
    if best == N and N > 1:
        half = max(d for d in divisors if d < N)  # 1 always divides N
        if half * C * HW >= min_split_block_elems:
            best = half
    return best


def cbam_pallas(x, w1, b1, w2, b2, wc, *, block_batch=None):
    N, C, H, W = x.shape
    HW = H * W
    hidden = w1.shape[1]
    itemsize = jnp.dtype(x.dtype).itemsize
    nb = block_batch if block_batch is not None else _pick_block_batch(
        N, C, HW, itemsize)
    assert N % nb == 0

    x_flat = x.reshape(N, C, HW)                  # lane-dense HBM layout
    # f32 conv matrix keeps the 1e-5 validation tolerance; on v6e/v7x a bf16
    # matrix (half the VMEM/vld footprint) is a valid looser-tolerance option.
    convmat = _build_conv_matrix(wc, H, W, jnp.float32)   # (2*HW, HW)

    # Advisory cost model for the XLA scheduler.
    flops = (4 * N * C * HW                       # pools + x*ca + x1*sa
             + 2 * N * (2 * HW) * HW              # spatial conv matmul
             + 2 * 2 * N * 2 * C * hidden)        # fused MLP matmuls
    transcendentals = N * C + N * HW              # sigmoids
    bytes_accessed = (2 * N * C * HW * itemsize
                      + 4 * (w1.size + b1.size + w2.size + b2.size)
                      + 4 * convmat.size)

    out_flat = pl.pallas_call(
        cbam_kernel,
        out_shape=jax.ShapeDtypeStruct((N, C, HW), x.dtype),
        grid=(N // nb,),
        in_specs=[
            pl.BlockSpec((nb, C, HW), lambda n: (n, 0, 0)),
            pl.BlockSpec((C, hidden), lambda n: (0, 0)),
            pl.BlockSpec((1, hidden), lambda n: (0, 0)),
            pl.BlockSpec((hidden, C), lambda n: (0, 0)),
            pl.BlockSpec((1, C), lambda n: (0, 0)),
            pl.BlockSpec((2 * HW, HW), lambda n: (0, 0)),
        ],
        out_specs=pl.BlockSpec((nb, C, HW), lambda n: (n, 0, 0)),
        compiler_params=pltpu.CompilerParams(
            dimension_semantics=("parallel",),     # batch axis over v7x's 2 TCs
            vmem_limit_bytes=32 * 1024 * 1024,     # explicit; safe on v5e/v6e/v7x
        ),
        cost_estimate=pl.CostEstimate(
            flops=int(flops),
            transcendentals=int(transcendentals),
            bytes_accessed=int(bytes_accessed),
        ),
    )(x_flat, w1, b1, w2, b2, convmat)
    return out_flat.reshape(N, C, H, W)


def cbam_ref(x, w1, b1, w2, b2, wc):
    """Pure-JAX reference mirroring the PyTorch forward."""
    avg_c = x.mean(axis=(2, 3))                     # (N, C)
    max_c = x.max(axis=(2, 3))                      # (N, C)

    def mlp(v):
        return jnp.maximum(v @ w1 + b1, 0.0) @ w2 + b2

    ca = jax.nn.sigmoid(mlp(avg_c) + mlp(max_c))    # (N, C)
    x1 = x * ca[:, :, None, None]

    avg_s = x1.mean(axis=1)                         # (N, H, W)
    max_s = x1.max(axis=1)
    xc = jnp.stack([avg_s, max_s], axis=1)          # (N, 2, H, W)
    conv = lax.conv_general_dilated(
        xc, wc[None], window_strides=(1, 1), padding=((3, 3), (3, 3)),
        dimension_numbers=("NCHW", "OIHW", "NCHW"))  # (N, 1, H, W)
    sa = jax.nn.sigmoid(conv)
    return x1 * sa


if __name__ == "__main__":
    N, C, H, W = 2, 32, 16, 16
    ratio = 16
    hidden = C // ratio

    key = jax.random.PRNGKey(0)
    kx, k1, k2, k3, k4, k5 = jax.random.split(key, 6)

    x = jax.random.normal(kx, (N, C, H, W), jnp.float32)
    # MLP: Linear(C -> hidden, bias), ReLU, Linear(hidden -> C, bias)
    w1 = jax.random.normal(k1, (C, hidden), jnp.float32) * 0.2
    b1 = jax.random.normal(k2, (1, hidden), jnp.float32) * 0.1
    w2 = jax.random.normal(k3, (hidden, C), jnp.float32) * 0.2
    b2 = jax.random.normal(k4, (1, C), jnp.float32) * 0.1
    # SpatialAttention Conv2d(2, 1, kernel_size=7, padding=3, bias=False)
    wc = jax.random.normal(k5, (2, 7, 7), jnp.float32) * 0.1

    out = cbam_pallas(x, w1, b1, w2, b2, wc)
    jax.block_until_ready(out)

    ref = cbam_ref(x, w1, b1, w2, b2, wc)
    assert out.shape == (N, C, H, W)
    assert jnp.allclose(out, ref, atol=1e-5, rtol=1e-5)

    print("KERNEL_OK")
</pallas_src>

<mosaic_0001>
module attributes {stable_mosaic.version = 11 : i64} {
  func.func @cbam_kernel(%arg0: i32, %arg1: memref<2x32x256xf32, #tpu.memory_space<vmem>>, %arg2: memref<32x2xf32, #tpu.memory_space<vmem>>, %arg3: memref<1x2xf32, #tpu.memory_space<vmem>>, %arg4: memref<2x32xf32, #tpu.memory_space<vmem>>, %arg5: memref<1x32xf32, #tpu.memory_space<vmem>>, %arg6: memref<512x256xf32, #tpu.memory_space<vmem>>, %arg7: memref<2x32x256xf32, #tpu.memory_space<vmem>>) attributes {dimension_semantics = [#tpu.dimension_semantics<parallel>], iteration_bounds = array<i64: 1>, scalar_prefetch = 0 : i64, scratch_operands = 0 : i64, tpu.core_type = #tpu.core_type<tc>, window_params = [{transform_indices = @transform_0, window_bounds = array<i64: 2, 32, 256>}, {pipeline_mode = #tpu.pipeline_mode<synchronous>, transform_indices = @transform_1, window_bounds = array<i64: 32, 2>}, {pipeline_mode = #tpu.pipeline_mode<synchronous>, transform_indices = @transform_2, window_bounds = array<i64: 1, 2>}, {pipeline_mode = #tpu.pipeline_mode<synchronous>, transform_indices = @transform_3, window_bounds = array<i64: 2, 32>}, {pipeline_mode = #tpu.pipeline_mode<synchronous>, transform_indices = @transform_4, window_bounds = array<i64: 1, 32>}, {pipeline_mode = #tpu.pipeline_mode<synchronous>, transform_indices = @transform_5, window_bounds = array<i64: 512, 256>}, {transform_indices = @transform_6, window_bounds = array<i64: 2, 32, 256>}]} {
    %c0 = arith.constant 0 : index
    %c0_0 = arith.constant 0 : index
    %c0_1 = arith.constant 0 : index
    %0 = vector.load %arg1[%c0, %c0_0, %c0_1] : memref<2x32x256xf32, #tpu.memory_space<vmem>>, vector<2x32x256xf32>
    %cst = arith.constant dense<0.000000e+00> : vector<2x32xf32>
    %1 = vector.multi_reduction <add>, %0, %cst [2] : vector<2x32x256xf32> to vector<2x32xf32>
    %cst_2 = arith.constant 2.560000e+02 : f32
    %2 = vector.broadcast %cst_2 : f32 to vector<2x32xf32>
    %3 = arith.divf %1, %2 : vector<2x32xf32>
    %cst_3 = arith.constant dense<0xFF800000> : vector<2x32xf32>
    %4 = vector.multi_reduction <maximumf>, %0, %cst_3 [2] : vector<2x32x256xf32> to vector<2x32xf32>
    %5 = tpu.concatenate %3, %4 in 0 : vector<2x32xf32>, vector<2x32xf32> -> vector<4x32xf32>
    %c0_4 = arith.constant 0 : index
    %c0_5 = arith.constant 0 : index
    %6 = vector.load %arg2[%c0_4, %c0_5] : memref<32x2xf32, #tpu.memory_space<vmem>>, vector<32x2xf32>
    %c0_6 = arith.constant 0 : index
    %c0_7 = arith.constant 0 : index
    %7 = vector.load %arg3[%c0_6, %c0_7] : memref<1x2xf32, #tpu.memory_space<vmem>>, vector<1x2xf32>
    %c0_8 = arith.constant 0 : index
    %c0_9 = arith.constant 0 : index
    %8 = vector.load %arg4[%c0_8, %c0_9] : memref<2x32xf32, #tpu.memory_space<vmem>>, vector<2x32xf32>
    %c0_10 = arith.constant 0 : index
    %c0_11 = arith.constant 0 : index
    %9 = vector.load %arg5[%c0_10, %c0_11] : memref<1x32xf32, #tpu.memory_space<vmem>>, vector<1x32xf32>
    %cst_12 = arith.constant dense<0.000000e+00> : vector<4x2xf32>
    %10 = tpu.matmul %5, %6, %cst_12 {dimension_numbers = #tpu.dot_dimension_numbers<[1], [0], [0], [1], [0, 0, 1, 1], [], []>} : vector<4x32xf32>, vector<32x2xf32>, vector<4x2xf32> -> vector<4x2xf32>
    %11 = vector.broadcast %7 : vector<1x2xf32> to vector<4x2xf32>
    %12 = arith.addf %10, %11 : vector<4x2xf32>
    %cst_13 = arith.constant 0.000000e+00 : f32
    %13 = vector.broadcast %cst_13 : f32 to vector<4x2xf32>
    %14 = arith.maximumf %12, %13 : vector<4x2xf32>
    %cst_14 = arith.constant dense<0.000000e+00> : vector<4x32xf32>
    %15 = tpu.matmul %14, %8, %cst_14 {dimension_numbers = #tpu.dot_dimension_numbers<[1], [0], [0], [1], [0, 0, 1, 1], [], []>} : vector<4x2xf32>, vector<2x32xf32>, vector<4x32xf32> -> vector<4x32xf32>
    %16 = vector.broadcast %9 : vector<1x32xf32> to vector<4x32xf32>
    %17 = arith.addf %15, %16 : vector<4x32xf32>
    %18 = vector.extract_strided_slice %17 {offsets = [0, 0], sizes = [2, 32], strides = [1, 1]} : vector<4x32xf32> to vector<2x32xf32>
    %19 = vector.extract_strided_slice %17 {offsets = [2, 0], sizes = [2, 32], strides = [1, 1]} : vector<4x32xf32> to vector<2x32xf32>
    %20 = arith.addf %18, %19 : vector<2x32xf32>
    %21 = arith.negf %20 : vector<2x32xf32>
    %22 = math.exp %21 : vector<2x32xf32>
    %cst_15 = arith.constant 1.000000e+00 : f32
    %23 = vector.broadcast %cst_15 : f32 to vector<2x32xf32>
    %24 = arith.addf %23, %22 : vector<2x32xf32>
    %25 = arith.divf %23, %24 : vector<2x32xf32>
    %26 = vector.shape_cast %25 : vector<2x32xf32> to vector<2x32x1xf32>
    %27 = vector.broadcast %26 : vector<2x32x1xf32> to vector<2x32x256xf32>
    %28 = arith.mulf %0, %27 : vector<2x32x256xf32>
    %cst_16 = arith.constant dense<0.000000e+00> : vector<2x256xf32>
    %29 = vector.multi_reduction <add>, %28, %cst_16 [1] : vector<2x32x256xf32> to vector<2x256xf32>
    %cst_17 = arith.constant 3.200000e+01 : f32
    %30 = vector.broadcast %cst_17 : f32 to vector<2x256xf32>
    %31 = arith.divf %29, %30 : vector<2x256xf32>
    %cst_18 = arith.constant dense<0xFF800000> : vector<2x256xf32>
    %32 = vector.multi_reduction <maximumf>, %28, %cst_18 [1] : vector<2x32x256xf32> to vector<2x256xf32>
    %33 = tpu.concatenate %31, %32 in 1 : vector<2x256xf32>, vector<2x256xf32> -> vector<2x512xf32>
    %c0_19 = arith.constant 0 : index
    %c0_20 = arith.constant 0 : index
    %34 = vector.load %arg6[%c0_19, %c0_20] : memref<512x256xf32, #tpu.memory_space<vmem>>, vector<512x256xf32>
    %cst_21 = arith.constant dense<0.000000e+00> : vector<2x256xf32>
    %35 = tpu.matmul %33, %34, %cst_21 {dimension_numbers = #tpu.dot_dimension_numbers<[1], [0], [0], [1], [0, 0, 1, 1], [], []>} : vector<2x512xf32>, vector<512x256xf32>, vector<2x256xf32> -> vector<2x256xf32>
    %36 = arith.negf %35 : vector<2x256xf32>
    %37 = math.exp %36 : vector<2x256xf32>
    %cst_22 = arith.constant 1.000000e+00 : f32
    %38 = vector.broadcast %cst_22 : f32 to vector<2x256xf32>
    %39 = arith.addf %38, %37 : vector<2x256xf32>
    %40 = arith.divf %38, %39 : vector<2x256xf32>
    %41 = vector.shape_cast %40 : vector<2x256xf32> to vector<2x1x256xf32>
    %42 = vector.broadcast %41 : vector<2x1x256xf32> to vector<2x32x256xf32>
    %43 = arith.mulf %28, %42 : vector<2x32x256xf32>
    %c0_23 = arith.constant 0 : index
    %c0_24 = arith.constant 0 : index
    %c0_25 = arith.constant 0 : index
    %44 = vector.load %arg7[%c0_23, %c0_24, %c0_25] : memref<2x32x256xf32, #tpu.memory_space<vmem>>, vector<2x32x256xf32>
    tpu.vector_store %arg7[%c0_23, %c0_24, %c0_25], %43 {strides = array<i32>} : memref<2x32x256xf32, #tpu.memory_space<vmem>>, vector<2x32x256xf32>,
    return
  }
  func.func @transform_0(%arg0: i32) -> (i32, i32, i32) {
    %c0_i32 = arith.constant 0 : i32
    %c0_i32_0 = arith.constant 0 : i32
    %c0_i32_1 = arith.constant 0 : i32
    return %arg0, %c0_i32, %c0_i32_0 : i32, i32, i32
  }
  func.func @transform_1(%arg0: i32) -> (i32, i32) {
    %c0_i32 = arith.constant 0 : i32
    %c0_i32_0 = arith.constant 0 : i32
    %c0_i32_1 = arith.constant 0 : i32
    return %c0_i32, %c0_i32_0 : i32, i32
  }
  func.func @transform_2(%arg0: i32) -> (i32, i32) {
    %c0_i32 = arith.constant 0 : i32
    %c0_i32_0 = arith.constant 0 : i32
    %c0_i32_1 = arith.constant 0 : i32
    return %c0_i32, %c0_i32_0 : i32, i32
  }
  func.func @transform_3(%arg0: i32) -> (i32, i32) {
    %c0_i32 = arith.constant 0 : i32
    %c0_i32_0 = arith.constant 0 : i32
    %c0_i32_1 = arith.constant 0 : i32
    return %c0_i32, %c0_i32_0 : i32, i32
  }
  func.func @transform_4(%arg0: i32) -> (i32, i32) {
    %c0_i32 = arith.constant 0 : i32
    %c0_i32_0 = arith.constant 0 : i32
    %c0_i32_1 = arith.constant 0 : i32
    return %c0_i32, %c0_i32_0 : i32, i32
  }
  func.func @transform_5(%arg0: i32) -> (i32, i32) {
    %c0_i32 = arith.constant 0 : i32
    %c0_i32_0 = arith.constant 0 : i32
    %c0_i32_1 = arith.constant 0 : i32
    return %c0_i32, %c0_i32_0 : i32, i32
  }
  func.func @transform_6(%arg0: i32) -> (i32, i32, i32) {
    %c0_i32 = arith.constant 0 : i32
    %c0_i32_0 = arith.constant 0 : i32
    %c0_i32_1 = arith.constant 0 : i32
    return %arg0, %c0_i32, %c0_i32_0 : i32, i32, i32
  }
}

</mosaic_0001>

<llo_original>
// kernel: tpu_custom_call.1
$region0: #{tpu_custom_call.1}
  #allocation0 [shape = 'u32[]', space=smem, size = 0x4, offset = 0x4, fixed_abs, tag = 'smem constant byte address 0x4 - core index']
  #allocation1 [shape = 'u32[72,128]{1,0:T(1,128)}', space=vmem, size = 0x9000, scoped, tag = 'internal scratch']
  %s0 = inlined_call_operand.hbm [shape: f32[2,32,256], index: 0, kind: input, shape index: {}]
  %s1 = inlined_call_operand.vmem [shape: f32[32,2], index: 1, kind: input, shape index: {}]
  %s2 = inlined_call_operand.vmem [shape: f32[1,2], index: 2, kind: input, shape index: {}]
  %s3 = inlined_call_operand.vmem [shape: f32[2,32], index: 3, kind: input, shape index: {}]
  %s4 = inlined_call_operand.vmem [shape: f32[1,32], index: 4, kind: input, shape index: {}]
  %s5 = inlined_call_operand.hbm [shape: f32[512,256], index: 5, kind: input, shape index: {}]
  %s6 = inlined_call_operand.hbm [shape: f32[2,32,256], index: 6, kind: output, shape index: {}]
  %s7 = sld [smem:[#allocation0]]
  $region42: #{tpu_custom_call.1} parent=0
    _
  %s9 = ssub.s32 1, %s7
  %s10 = scalar_select 0, %s9, %s7
  $region1: #{tpu_custom_call.1} parent=0
    #allocation2 [shape = 'u8[65536]{0}', space=vmem, size = 0x10000, scoped, tag = 'input window, operand 0, single buffered']
    #allocation3 [shape = 's32[1]{0}', space=sflag, size = 0x4, scoped, tag = 'scoped memory for tpu_custom_call.1']
    #allocation4 [shape = 's32[1]{0}', space=sflag, size = 0x4, scoped, tag = 'scoped memory for tpu_custom_call.1']
    #allocation5 [shape = 'u8[524288]{0}', space=vmem, size = 0x80000, scoped, tag = 'input window, operand 5, single buffered']
    #allocation6 [shape = 's32[1]{0}', space=sflag, size = 0x4, scoped, tag = 'scoped memory for tpu_custom_call.1']
    #allocation7 [shape = 'u8[65536]{0}', space=vmem, size = 0x10000, scoped, tag = 'output window, operand 0, single buffered']
    %11 = vsyncpa [#allocation3], 0
    %12 = vsyncpa [#allocation6], 0
    %13 = vsyncpa [#allocation4], 0
    // Predicated region
    $region2: #{tpu_custom_call.1} parent=1 // pred_check
      _
    $region3: #{tpu_custom_call.1} parent=1 // pred_check_branch
      %15 = sbr.rel (0) target = $region5
    $region4: #{tpu_custom_call.1} parent=1 // pred_region
      %17 = vsyncadd [#allocation3], 0
      %s18 = sshll.u32 %s0, 4
      %s19 = int_to_ptr.hbm [resolvable:$true] %s18
      %s20 = sshll.u32 [#allocation2], 4
      %s21 = int_to_ptr.vmem [resolvable:$true] %s20
      %26 = dma.hbm_to_vmem [thread:$0]  %s19, 2048, %s21, [#allocation3], 256, 256, 16
    $region5: #{tpu_custom_call.1} parent=1 // pred_fallthru
      _
    // Predicated region
    $region6: #{tpu_custom_call.1} parent=1 // pred_check
      _
    $region7: #{tpu_custom_call.1} parent=1 // pred_check_branch
      %28 = sbr.rel (0) target = $region9
    $region8: #{tpu_custom_call.1} parent=1 // pred_region
      _
    $region9: #{tpu_custom_call.1} parent=1 // pred_fallthru
      _
    // Predicated region
    $region10: #{tpu_custom_call.1} parent=1 // pred_check
      _
    $region11: #{tpu_custom_call.1} parent=1 // pred_check_branch
      %30 = sbr.rel (0) target = $region13
    $region12: #{tpu_custom_call.1} parent=1 // pred_region
      _
    $region13: #{tpu_custom_call.1} parent=1 // pred_fallthru
      _
    // Predicated region
    $region14: #{tpu_custom_call.1} parent=1 // pred_check
      _
    $region15: #{tpu_custom_call.1} parent=1 // pred_check_branch
      %32 = sbr.rel (0) target = $region17
    $region16: #{tpu_custom_call.1} parent=1 // pred_region
      _
    $region17: #{tpu_custom_call.1} parent=1 // pred_fallthru
      _
    // Predicated region
    $region18: #{tpu_custom_call.1} parent=1 // pred_check
      _
    $region19: #{tpu_custom_call.1} parent=1 // pred_check_branch
      %34 = sbr.rel (0) target = $region21
    $region20: #{tpu_custom_call.1} parent=1 // pred_region
      _
    $region21: #{tpu_custom_call.1} parent=1 // pred_fallthru
      _
    // Predicated region
    $region22: #{tpu_custom_call.1} parent=1 // pred_check
      _
    $region23: #{tpu_custom_call.1} parent=1 // pred_check_branch
      %36 = sbr.rel (0) target = $region25
    $region24: #{tpu_custom_call.1} parent=1 // pred_region
      %38 = vsyncadd [#allocation6], 0
      %s39 = sshll.u32 %s5, 4
      %s40 = int_to_ptr.hbm [resolvable:$true] %s39
      %s41 = sshll.u32 [#allocation5], 4
      %s42 = int_to_ptr.vmem [resolvable:$true] %s41
      %47 = dma.hbm_to_vmem [thread:$0]  %s40, 16384, %s42, [#allocation6], 256, 256, 16
    $region25: #{tpu_custom_call.1} parent=1 // pred_fallthru
      _
    // Predicated region
    $region26: #{tpu_custom_call.1} parent=1 // pred_check
      _
    $region27: #{tpu_custom_call.1} parent=1 // pred_check_branch
      %49 = sbr.rel (0) target = $region29
    $region28: #{tpu_custom_call.1} parent=1 // pred_region
      %51 = dma.done [#allocation3], 2048
    $region29: #{tpu_custom_call.1} parent=1 // pred_fallthru
      _
    // Predicated region
    $region30: #{tpu_custom_call.1} parent=1 // pred_check
      _
    $region31: #{tpu_custom_call.1} parent=1 // pred_check_branch
      %53 = sbr.rel (0) target = $region33
    $region32: #{tpu_custom_call.1} parent=1 // pred_region
      %55 = dma.done [#allocation6], 16384
    $region33: #{tpu_custom_call.1} parent=1 // pred_fallthru
      _
    %v56 = vld [vmem:[#allocation2] sm:$0xff]
    %v57 = vld [vmem:[#allocation2 + $0x8] sm:$0xff]
    %v58 = vld [vmem:[#allocation2 + $0x10] sm:$0xff]
    %v59 = vld [vmem:[#allocation2 + $0x18] sm:$0xff]
    %v60 = vld [vmem:[#allocation2 + $0x20] sm:$0xff]
    %v61 = vld [vmem:[#allocation2 + $0x28] sm:$0xff]
    %v62 = vld [vmem:[#allocation2 + $0x30] sm:$0xff]
    %v63 = vld [vmem:[#allocation2 + $0x38] sm:$0xff]
    %v64 = vld [vmem:[#allocation2 + $0x40] sm:$0xff]
    %v65 = vld [vmem:[#allocation2 + $0x48] sm:$0xff]
    %v66 = vld [vmem:[#allocation2 + $0x50] sm:$0xff]
    %v67 = vld [vmem:[#allocation2 + $0x58] sm:$0xff]
    %v68 = vld [vmem:[#allocation2 + $0x60] sm:$0xff]
    %v69 = vld [vmem:[#allocation2 + $0x68] sm:$0xff]
    %v70 = vld [vmem:[#allocation2 + $0x70] sm:$0xff]
    %v71 = vld [vmem:[#allocation2 + $0x78] sm:$0xff]
    %v72 = vadd.f32 %v56, %v57
    %73 = vadd.xlane.f32.xlu0 %v72
    %v74 = vpop.xlane.xlu0 %73
    %v75 = vadd.f32 %v58, %v59
    %76 = vadd.xlane.f32.xlu0 %v75
    %v77 = vpop.xlane.xlu0 %76
    %v78 = vadd.f32 %v60, %v61
    %79 = vadd.xlane.f32.xlu0 %v78
    %v80 = vpop.xlane.xlu0 %79
    %v81 = vadd.f32 %v62, %v63
    %82 = vadd.xlane.f32.xlu0 %v81
    %v83 = vpop.xlane.xlu0 %82
    %v84 = vadd.f32 %v64, %v65
    %85 = vadd.xlane.f32.xlu0 %v84
    %v86 = vpop.xlane.xlu0 %85
    %v87 = vadd.f32 %v66, %v67
    %88 = vadd.xlane.f32.xlu0 %v87
    %v89 = vpop.xlane.xlu0 %88
    %v90 = vadd.f32 %v68, %v69
    %91 = vadd.xlane.f32.xlu0 %v90
    %v92 = vpop.xlane.xlu0 %91
    %v93 = vadd.f32 %v70, %v71
    %94 = vadd.xlane.f32.xlu0 %v93
    %v95 = vpop.xlane.xlu0 %94
    %v96 = vrcp.pop 256.0
    %v97 = vmul.f32 256.0, %v96
    %v98 = vsub.f32 1.0, %v97
    %v99 = vmul.f32 %v96, %v98
    %v100 = vadd.f32 %v96, %v99
    %vm101 = vweird.f32 %v96
    %v102 = vsel %vm101, %v96, %v100
    %v103 = vmul.f32 %v74, %v102
    %v104 = vmul.f32 %v77, %v102
    %v105 = vmul.f32 %v80, %v102
    %v106 = vmul.f32 %v83, %v102
    %v107 = vmul.f32 %v86, %v102
    %v108 = vmul.f32 %v89, %v102
    %v109 = vmul.f32 %v92, %v102
    %v110 = vmul.f32 %v95, %v102
    %v111 = vmax.f32 %v56, %v57
    %112 = vmax.xlane.f32.xlu0 %v111
    %v113 = vpop.xlane.xlu0 %112
    %v114 = vmax.f32 %v58, %v59
    %115 = vmax.xlane.f32.xlu0 %v114
    %v116 = vpop.xlane.xlu0 %115
    %v117 = vmax.f32 %v60, %v61
    %118 = vmax.xlane.f32.xlu0 %v117
    %v119 = vpop.xlane.xlu0 %118
    %v120 = vmax.f32 %v62, %v63
    %121 = vmax.xlane.f32.xlu0 %v120
    %v122 = vpop.xlane.xlu0 %121
    %v123 = vmax.f32 %v64, %v65
    %124 = vmax.xlane.f32.xlu0 %v123
    %v125 = vpop.xlane.xlu0 %124
    %v126 = vmax.f32 %v66, %v67
    %127 = vmax.xlane.f32.xlu0 %v126
    %v128 = vpop.xlane.xlu0 %127
    %v129 = vmax.f32 %v68, %v69
    %130 = vmax.xlane.f32.xlu0 %v129
    %v131 = vpop.xlane.xlu0 %130
    %v132 = vmax.f32 %v70, %v71
    %133 = vmax.xlane.f32.xlu0 %v132
    %v134 = vpop.xlane.xlu0 %133
    %v143 = vlaneseq
    %v144 = vand.u32 %v143, 127
    %v145 = vperm.slane %v103, %v144
    %v146 = vadd.s32 %v144, 4294967288
    %v147 = vperm.slane %v104, %v146
    %vm148 = vcmask 130112
    %v149 = vsel %vm148, %v147, %v145
    %v150 = vadd.s32 %v144, 4294967280
    %v151 = vperm.slane %v105, %v150
    %vm152 = vcmask 195712
    %v153 = vsel %vm152, %v151, %v149
    %v154 = vadd.s32 %v144, 4294967272
    %v155 = vperm.slane %v106, %v154
    %vm156 = vcmask 261312
    %v157 = vsel %vm156, %v155, %v153
    %v158 = vperm.slane %v107, %v144
    %v159 = vperm.slane %v108, %v146
    %v160 = vsel %vm148, %v159, %v158
    %v161 = vperm.slane %v109, %v150
    %v162 = vsel %vm152, %v161, %v160
    %v163 = vperm.slane %v110, %v154
    %v164 = vsel %vm156, %v163, %v162
    %vm165 = vcmask 1041409
    %v166 = vsel %vm165, %v164, %v157
    %v176 = vperm.slane %v113, %v144
    %v177 = vperm.slane %v116, %v146
    %v178 = vsel %vm148, %v177, %v176
    %v179 = vperm.slane %v119, %v150
    %v180 = vsel %vm152, %v179, %v178
    %v181 = vperm.slane %v122, %v154
    %v182 = vsel %vm156, %v181, %v180
    %v183 = vperm.slane %v125, %v144
    %v184 = vperm.slane %v128, %v146
    %v185 = vsel %vm148, %v184, %v183
    %v186 = vperm.slane %v131, %v150
    %v187 = vsel %vm152, %v186, %v185
    %v188 = vperm.slane %v134, %v154
    %v189 = vsel %vm156, %v188, %v187
    %vm190 = vcmask 1043459
    %v191 = vsel %vm190, %v189, %v182
    %vm193 = vcmask 1041408
    %v194 = vsel %vm193, %v166, %v191
    %v195 = vld [vmem:[%s1] sm:$0xff]
    %v196 = vld [vmem:[%s1 + $0x8] sm:$0xff]
    %v197 = vld [vmem:[%s1 + $0x10] sm:$0xff]
    %v198 = vld [vmem:[%s1 + $0x18] sm:$0xff]
    %v199 = vld [vmem:[%s2] sm:$0x1]
    %v200 = vld [vmem:[%s3] sm:$0x3]
    %v201 = vld [vmem:[%s4] sm:$0x1]
    %v203 = vperm.slane %v199, 0
    %vm205 = vcmask 261120
    %v207 = vsel %vm205, %v194, 0
    %209 = vmatpush.msra.mxu0 0.0
    %210 = vmatpush.msra.mxu0 0.0
    %211 = vmatpush.msra.mxu0 0.0
    %212 = vmatpush.msra.mxu0 0.0
    %213 = vmatpush.msra.mxu0 0.0
    %214 = vmatpush.msra.mxu0 0.0
    %215 = vmatpush.msra.mxu0 0.0
    %216 = vmatpush.msra.mxu0 0.0
    %217 = vmatpush.msra.mxu0 0.0
    %218 = vmatpush.msra.mxu0 0.0
    %219 = vmatpush.msra.mxu0 0.0
    %220 = vmatpush.msra.mxu0 0.0
    %221 = vmatpush.msra.mxu0 %v198
    %222 = vmatpush.msra.mxu0 %v197
    %223 = vmatpush.msra.mxu0 %v196
    %224 = vmatpush.msra.mxu0 %v195
    %225 = vmatmul.f32.gmra.mxu0 %v207
    %v226 = vpop.f32.mrf.mxu0
    %v227 = vadd.f32 %v203, %v226
    %228 = vdwg.mxu0
    %v229 = vmax.f32 %v227, 0.0
    %v231 = vperm.slane %v201, 0
    %vm233 = vcmask 15360
    %v235 = vsel %vm233, %v229, 0
    %v238 = vsel %vm193, %v200, 0
    %240 = vmatpush.msra.mxu0 0.0
    %241 = vmatpush.msra.mxu0 0.0
    %242 = vmatpush.msra.mxu0 0.0
    %243 = vmatpush.msra.mxu0 0.0
    %244 = vmatpush.msra.mxu0 0.0
    %245 = vmatpush.msra.mxu0 0.0
    %246 = vmatpush.msra.mxu0 0.0
    %247 = vmatpush.msra.mxu0 0.0
    %248 = vmatpush.msra.mxu0 0.0
    %249 = vmatpush.msra.mxu0 0.0
    %250 = vmatpush.msra.mxu0 0.0
    %251 = vmatpush.msra.mxu0 0.0
    %252 = vmatpush.msra.mxu0 0.0
    %253 = vmatpush.msra.mxu0 0.0
    %254 = vmatpush.msra.mxu0 0.0
    %255 = vmatpush.msra.mxu0 %v238
    %256 = vmatmul.f32.gmra.mxu0 %v235
    %v257 = vpop.f32.mrf.mxu0
    %v258 = vadd.f32 %v231, %v257
    %259 = vdwg.mxu0
    %v261 = vrot.slane %v258, 2
    %v263 = vadd.f32 %v258, %v261
    %v264 = vxor.u32 %v263, 2147483648
    %v265 = vmul.f32 %v264, 1.442695
    %v266 = vpow.pop %v265
    %v267 = vadd.f32 %v266, 1.0
    %v268 = vrcp.pop %v267
    %v269 = vmul.f32 %v267, %v268
    %v270 = vsub.f32 1.0, %v269
    %v271 = vmul.f32 %v268, %v270
    %v272 = vadd.f32 %v268, %v271
    %vm273 = vweird.f32 %v267
    %vm274 = vweird.f32 %v268
    %vm275 = vmor %vm273, %vm274
    %v276 = vsel %vm275, %v268, %v272
    %v277 = vand.u32 2147483647, %v267
    %vm278 = vcmp.eq.f32.partialorder %v277, 8.507059e+37
    %v279 = vand.u32 %v267, 2147483648
    %v280 = vor.u32 1.1754944e-38, %v279
    %v281 = vsel %vm278, %v280, %v276
    %v282 = vmul.f32 1.0, %v281
    %v283 = vperm.slane %v282, 0
    %v284 = vlaneseq
    %v285 = vshrl.u32 %v284, 7
    %287 = vset.pattern.permute.xlu0 %v285
    %288 = vperm.xlu0 %287, %v283
    %v289 = vpop.permute.xlu0 %288
    %v290 = vlaneseq
    %v291 = vshrl.u32 %v290, 7
    %v292 = vadd.s32 %v291, 8
    %293 = vset.pattern.permute.xlu0 %v292
    %294 = vperm.xlu0 %293, %v283
    %v295 = vpop.permute.xlu0 %294
    %v296 = vlaneseq
    %v297 = vshrl.u32 %v296, 7
    %v298 = vadd.s32 %v297, 16
    %299 = vset.pattern.permute.xlu0 %v298
    %300 = vperm.xlu0 %299, %v283
    %v301 = vpop.permute.xlu0 %300
    %v302 = vlaneseq
    %v303 = vshrl.u32 %v302, 7
    %v304 = vadd.s32 %v303, 24
    %305 = vset.pattern.permute.xlu0 %v304
    %306 = vperm.xlu0 %305, %v283
    %v307 = vpop.permute.xlu0 %306
    %v308 = vperm.slane %v282, 1
    %v309 = vlaneseq
    %v310 = vshrl.u32 %v309, 7
    %312 = vset.pattern.permute.xlu0 %v310
    %313 = vperm.xlu0 %312, %v308
    %v314 = vpop.permute.xlu0 %313
    %v315 = vlaneseq
    %v316 = vshrl.u32 %v315, 7
    %v317 = vadd.s32 %v316, 8
    %318 = vset.pattern.permute.xlu0 %v317
    %319 = vperm.xlu0 %318, %v308
    %v320 = vpop.permute.xlu0 %319
    %v321 = vlaneseq
    %v322 = vshrl.u32 %v321, 7
    %v323 = vadd.s32 %v322, 16
    %324 = vset.pattern.permute.xlu0 %v323
    %325 = vperm.xlu0 %324, %v308
    %v326 = vpop.permute.xlu0 %325
    %v327 = vlaneseq
    %v328 = vshrl.u32 %v327, 7
    %v329 = vadd.s32 %v328, 24
    %330 = vset.pattern.permute.xlu0 %v329
    %331 = vperm.xlu0 %330, %v308
    %v332 = vpop.permute.xlu0 %331
    %v333 = vmul.f32 %v56, %v289
    %v334 = vmul.f32 %v57, %v289
    %v335 = vmul.f32 %v58, %v295
    %v336 = vmul.f32 %v59, %v295
    %v337 = vmul.f32 %v60, %v301
    %v338 = vmul.f32 %v61, %v301
    %v339 = vmul.f32 %v62, %v307
    %v340 = vmul.f32 %v63, %v307
    %v341 = vmul.f32 %v64, %v314
    %v342 = vmul.f32 %v65, %v314
    %v343 = vmul.f32 %v66, %v320
    %v344 = vmul.f32 %v67, %v320
    %v345 = vmul.f32 %v68, %v326
    %v346 = vmul.f32 %v69, %v326
    %v347 = vmul.f32 %v70, %v332
    %v348 = vmul.f32 %v71, %v332
    %v349 = vadd.f32 %v333, %v335
    %v350 = vadd.f32 %v349, %v337
    %v351 = vadd.f32 %v350, %v339
    %v352 = vrot.slane %v351, 4
    %v353 = vadd.f32 %v351, %v352
    %v354 = vrot.slane %v353, 2
    %v355 = vadd.f32 %v353, %v354
    %v356 = vrot.slane %v355, 1
    %v357 = vadd.f32 %v355, %v356
    %v358 = vadd.f32 %v334, %v336
    %v359 = vadd.f32 %v358, %v338
    %v360 = vadd.f32 %v359, %v340
    %v361 = vrot.slane %v360, 4
    %v362 = vadd.f32 %v360, %v361
    %v363 = vrot.slane %v362, 2
    %v364 = vadd.f32 %v362, %v363
    %v365 = vrot.slane %v364, 1
    %v366 = vadd.f32 %v364, %v365
    %v367 = vadd.f32 %v341, %v343
    %v368 = vadd.f32 %v367, %v345
    %v369 = vadd.f32 %v368, %v347
    %v370 = vrot.slane %v369, 4
    %v371 = vadd.f32 %v369, %v370
    %v372 = vrot.slane %v371, 2
    %v373 = vadd.f32 %v371, %v372
    %v374 = vrot.slane %v373, 1
    %v375 = vadd.f32 %v373, %v374
    %v376 = vadd.f32 %v342, %v344
    %v377 = vadd.f32 %v376, %v346
    %v378 = vadd.f32 %v377, %v348
    %v379 = vrot.slane %v378, 4
    %v380 = vadd.f32 %v378, %v379
    %v381 = vrot.slane %v380, 2
    %v382 = vadd.f32 %v380, %v381
    %v383 = vrot.slane %v382, 1
    %v384 = vadd.f32 %v382, %v383
    %v385 = vrcp.pop 32.0
    %v386 = vmul.f32 32.0, %v385
    %v387 = vsub.f32 1.0, %v386
    %v388 = vmul.f32 %v385, %v387
    %v389 = vadd.f32 %v385, %v388
    %vm390 = vweird.f32 %v385
    %v391 = vsel %vm390, %v385, %v389
    %v392 = vmul.f32 %v357, %v391
    %v393 = vmul.f32 %v366, %v391
    %v394 = vmul.f32 %v375, %v391
    %v395 = vmul.f32 %v384, %v391
    %v396 = vmax.f32 %v333, %v335
    %v397 = vmax.f32 %v396, %v337
    %v398 = vmax.f32 %v397, %v339
    %v399 = vrot.slane %v398, 4
    %v400 = vmax.f32 %v398, %v399
    %v401 = vrot.slane %v400, 2
    %v402 = vmax.f32 %v400, %v401
    %v403 = vrot.slane %v402, 1
    %v404 = vmax.f32 %v402, %v403
    %v405 = vmax.f32 %v334, %v336
    %v406 = vmax.f32 %v405, %v338
    %v407 = vmax.f32 %v406, %v340
    %v408 = vrot.slane %v407, 4
    %v409 = vmax.f32 %v407, %v408
    %v410 = vrot.slane %v409, 2
    %v411 = vmax.f32 %v409, %v410
    %v412 = vrot.slane %v411, 1
    %v413 = vmax.f32 %v411, %v412
    %v414 = vmax.f32 %v341, %v343
    %v415 = vmax.f32 %v414, %v345
    %v416 = vmax.f32 %v415, %v347
    %v417 = vrot.slane %v416, 4
    %v418 = vmax.f32 %v416, %v417
    %v419 = vrot.slane %v418, 2
    %v420 = vmax.f32 %v418, %v419
    %v421 = vrot.slane %v420, 1
    %v422 = vmax.f32 %v420, %v421
    %v423 = vmax.f32 %v342, %v344
    %v424 = vmax.f32 %v423, %v346
    %v425 = vmax.f32 %v424, %v348
    %v426 = vrot.slane %v425, 4
    %v427 = vmax.f32 %v425, %v426
    %v428 = vrot.slane %v427, 2
    %v429 = vmax.f32 %v427, %v428
    %v430 = vrot.slane %v429, 1
    %v431 = vmax.f32 %v429, %v430
    %v436 = vsel %vm165, %v394, %v392
    %v437 = vsel %vm165, %v395, %v393
    %v444 = vsel %vm165, %v422, %v404
    %v445 = vsel %vm165, %v431, %v413
    %v448 = vld [vmem:[#allocation5] sm:$0xff]
    %v449 = vld [vmem:[#allocation5 + $0x8] sm:$0xff]
    %v450 = vld [vmem:[#allocation5 + $0x10] sm:$0xff]
    %v451 = vld [vmem:[#allocation5 + $0x18] sm:$0xff]
    %v452 = vld [vmem:[#allocation5 + $0x20] sm:$0xff]
    %v453 = vld [vmem:[#allocation5 + $0x28] sm:$0xff]
    %v454 = vld [vmem:[#allocation5 + $0x30] sm:$0xff]
    %v455 = vld [vmem:[#allocation5 + $0x38] sm:$0xff]
    %v456 = vld [vmem:[#allocation5 + $0x40] sm:$0xff]
    %v457 = vld [vmem:[#allocation5 + $0x48] sm:$0xff]
    %v458 = vld [vmem:[#allocation5 + $0x50] sm:$0xff]
    %v459 = vld [vmem:[#allocation5 + $0x58] sm:$0xff]
    %v460 = vld [vmem:[#allocation5 + $0x60] sm:$0xff]
    %v461 = vld [vmem:[#allocation5 + $0x68] sm:$0xff]
    %v462 = vld [vmem:[#allocation5 + $0x70] sm:$0xff]
    %v463 = vld [vmem:[#allocation5 + $0x78] sm:$0xff]
    %v464 = vld [vmem:[#allocation5 + $0x80] sm:$0xff]
    %v465 = vld [vmem:[#allocation5 + $0x88] sm:$0xff]
    %v466 = vld [vmem:[#allocation5 + $0x90] sm:$0xff]
    %v467 = vld [vmem:[#allocation5 + $0x98] sm:$0xff]
    %v468 = vld [vmem:[#allocation5 + $0xa0] sm:$0xff]
    %v469 = vld [vmem:[#allocation5 + $0xa8] sm:$0xff]
    %v470 = vld [vmem:[#allocation5 + $0xb0] sm:$0xff]
    %v471 = vld [vmem:[#allocation5 + $0xb8] sm:$0xff]
    %v472 = vld [vmem:[#allocation5 + $0xc0] sm:$0xff]
    %v473 = vld [vmem:[#allocation5 + $0xc8] sm:$0xff]
    %v474 = vld [vmem:[#allocation5 + $0xd0] sm:$0xff]
    %v475 = vld [vmem:[#allocation5 + $0xd8] sm:$0xff]
    %v476 = vld [vmem:[#allocation5 + $0xe0] sm:$0xff]
    %v477 = vld [vmem:[#allocation5 + $0xe8] sm:$0xff]
    %v478 = vld [vmem:[#allocation5 + $0xf0] sm:$0xff]
    %v479 = vld [vmem:[#allocation5 + $0xf8] sm:$0xff]
    %v480 = vld [vmem:[#allocation5 + $0x100] sm:$0xff]
    %v481 = vld [vmem:[#allocation5 + $0x108] sm:$0xff]
    %v482 = vld [vmem:[#allocation5 + $0x110] sm:$0xff]
    %v483 = vld [vmem:[#allocation5 + $0x118] sm:$0xff]
    %v484 = vld [vmem:[#allocation5 + $0x120] sm:$0xff]
    %v485 = vld [vmem:[#allocation5 + $0x128] sm:$0xff]
    %v486 = vld [vmem:[#allocation5 + $0x130] sm:$0xff]
    %v487 = vld [vmem:[#allocation5 + $0x138] sm:$0xff]
    %v488 = vld [vmem:[#allocation5 + $0x140] sm:$0xff]
    %v489 = vld [vmem:[#allocation5 + $0x148] sm:$0xff]
    %v490 = vld [vmem:[#allocation5 + $0x150] sm:$0xff]
    %v491 = vld [vmem:[#allocation5 + $0x158] sm:$0xff]
    %v492 = vld [vmem:[#allocation5 + $0x160] sm:$0xff]
    %v493 = vld [vmem:[#allocation5 + $0x168] sm:$0xff]
    %v494 = vld [vmem:[#allocation5 + $0x170] sm:$0xff]
    %v495 = vld [vmem:[#allocation5 + $0x178] sm:$0xff]
    %v496 = vld [vmem:[#allocation5 + $0x180] sm:$0xff]
    %v497 = vld [vmem:[#allocation5 + $0x188] sm:$0xff]
    %v498 = vld [vmem:[#allocation5 + $0x190] sm:$0xff]
    %v499 = vld [vmem:[#allocation5 + $0x198] sm:$0xff]
    %v500 = vld [vmem:[#allocation5 + $0x1a0] sm:$0xff]
    %v501 = vld [vmem:[#allocation5 + $0x1a8] sm:$0xff]
    %v502 = vld [vmem:[#allocation5 + $0x1b0] sm:$0xff]
    %v503 = vld [vmem:[#allocation5 + $0x1b8] sm:$0xff]
    %v504 = vld [vmem:[#allocation5 + $0x1c0] sm:$0xff]
    %v505 = vld [vmem:[#allocation5 + $0x1c8] sm:$0xff]
    %v506 = vld [vmem:[#allocation5 + $0x1d0] sm:$0xff]
    %v507 = vld [vmem:[#allocation5 + $0x1d8] sm:$0xff]
    %v508 = vld [vmem:[#allocation5 + $0x1e0] sm:$0xff]
    %v509 = vld [vmem:[#allocation5 + $0x1e8] sm:$0xff]
    %v510 = vld [vmem:[#allocation5 + $0x1f0] sm:$0xff]
    %v511 = vld [vmem:[#allocation5 + $0x1f8] sm:$0xff]
    %v512 = vld [vmem:[#allocation5 + $0x200] sm:$0xff]
    %v513 = vld [vmem:[#allocation5 + $0x208] sm:$0xff]
    %v514 = vld [vmem:[#allocation5 + $0x210] sm:$0xff]
    %v515 = vld [vmem:[#allocation5 + $0x218] sm:$0xff]
    %v516 = vld [vmem:[#allocation5 + $0x220] sm:$0xff]
    %v517 = vld [vmem:[#allocation5 + $0x228] sm:$0xff]
    %v518 = vld [vmem:[#allocation5 + $0x230] sm:$0xff]
    %v519 = vld [vmem:[#allocation5 + $0x238] sm:$0xff]
    %v520 = vld [vmem:[#allocation5 + $0x240] sm:$0xff]
    %v521 = vld [vmem:[#allocation5 + $0x248] sm:$0xff]
    %v522 = vld [vmem:[#allocation5 + $0x250] sm:$0xff]
    %v523 = vld [vmem:[#allocation5 + $0x258] sm:$0xff]
    %v524 = vld [vmem:[#allocation5 + $0x260] sm:$0xff]
    %v525 = vld [vmem:[#allocation5 + $0x268] sm:$0xff]
    %v526 = vld [vmem:[#allocation5 + $0x270] sm:$0xff]
    %v527 = vld [vmem:[#allocation5 + $0x278] sm:$0xff]
    %v528 = vld [vmem:[#allocation5 + $0x280] sm:$0xff]
    %v529 = vld [vmem:[#allocation5 + $0x288] sm:$0xff]
    %v530 = vld [vmem:[#allocation5 + $0x290] sm:$0xff]
    %v531 = vld [vmem:[#allocation5 + $0x298] sm:$0xff]
    %v532 = vld [vmem:[#allocation5 + $0x2a0] sm:$0xff]
    %v533 = vld [vmem:[#allocation5 + $0x2a8] sm:$0xff]
    %v534 = vld [vmem:[#allocation5 + $0x2b0] sm:$0xff]
    %v535 = vld [vmem:[#allocation5 + $0x2b8] sm:$0xff]
    %v536 = vld [vmem:[#allocation5 + $0x2c0] sm:$0xff]
    %v537 = vld [vmem:[#allocation5 + $0x2c8] sm:$0xff]
    %v538 = vld [vmem:[#allocation5 + $0x2d0] sm:$0xff]
    %v539 = vld [vmem:[#allocation5 + $0x2d8] sm:$0xff]
    %v540 = vld [vmem:[#allocation5 + $0x2e0] sm:$0xff]
    %v541 = vld [vmem:[#allocation5 + $0x2e8] sm:$0xff]
    %v542 = vld [vmem:[#allocation5 + $0x2f0] sm:$0xff]
    %v543 = vld [vmem:[#allocation5 + $0x2f8] sm:$0xff]
    %v544 = vld [vmem:[#allocation5 + $0x300] sm:$0xff]
    %v545 = vld [vmem:[#allocation5 + $0x308] sm:$0xff]
    %v546 = vld [vmem:[#allocation5 + $0x310] sm:$0xff]
    %v547 = vld [vmem:[#allocation5 + $0x318] sm:$0xff]
    %v548 = vld [vmem:[#allocation5 + $0x320] sm:$0xff]
    %v549 = vld [vmem:[#allocation5 + $0x328] sm:$0xff]
    %v550 = vld [vmem:[#allocation5 + $0x330] sm:$0xff]
    %v551 = vld [vmem:[#allocation5 + $0x338] sm:$0xff]
    %v552 = vld [vmem:[#allocation5 + $0x340] sm:$0xff]
    %v553 = vld [vmem:[#allocation5 + $0x348] sm:$0xff]
    %v554 = vld [vmem:[#allocation5 + $0x350] sm:$0xff]
    %v555 = vld [vmem:[#allocation5 + $0x358] sm:$0xff]
    %v556 = vld [vmem:[#allocation5 + $0x360] sm:$0xff]
    %v557 = vld [vmem:[#allocation5 + $0x368] sm:$0xff]
    %v558 = vld [vmem:[#allocation5 + $0x370] sm:$0xff]
    %v559 = vld [vmem:[#allocation5 + $0x378] sm:$0xff]
    %v560 = vld [vmem:[#allocation5 + $0x380] sm:$0xff]
    %v561 = vld [vmem:[#allocation5 + $0x388] sm:$0xff]
    %v562 = vld [vmem:[#allocation5 + $0x390] sm:$0xff]
    %v563 = vld [vmem:[#allocation5 + $0x398] sm:$0xff]
    %v564 = vld [vmem:[#allocation5 + $0x3a0] sm:$0xff]
    %v565 = vld [vmem:[#allocation5 + $0x3a8] sm:$0xff]
    %v566 = vld [vmem:[#allocation5 + $0x3b0] sm:$0xff]
    %v567 = vld [vmem:[#allocation5 + $0x3b8] sm:$0xff]
    %v568 = vld [vmem:[#allocation5 + $0x3c0] sm:$0xff]
    %v569 = vld [vmem:[#allocation5 + $0x3c8] sm:$0xff]
    %v570 = vld [vmem:[#allocation5 + $0x3d0] sm:$0xff]
    %v571 = vld [vmem:[#allocation5 + $0x3d8] sm:$0xff]
    %v572 = vld [vmem:[#allocation5 + $0x3e0] sm:$0xff]
    %v573 = vld [vmem:[#allocation5 + $0x3e8] sm:$0xff]
    %v574 = vld [vmem:[#allocation5 + $0x3f0] sm:$0xff]
    %v575 = vld [vmem:[#allocation5 + $0x3f8] sm:$0xff]
    %576 = vmatpush.msra.mxu0 %v478
    %577 = vmatpush.msra.mxu0 %v476
    %578 = vmatpush.msra.mxu0 %v474
    %579 = vmatpush.msra.mxu0 %v472
    %580 = vmatpush.msra.mxu0 %v470
    %581 = vmatpush.msra.mxu0 %v468
    %582 = vmatpush.msra.mxu0 %v466
    %583 = vmatpush.msra.mxu0 %v464
    %584 = vmatpush.msra.mxu0 %v462
    %585 = vmatpush.msra.mxu0 %v460
    %586 = vmatpush.msra.mxu0 %v458
    %587 = vmatpush.msra.mxu0 %v456
    %588 = vmatpush.msra.mxu0 %v454
    %589 = vmatpush.msra.mxu0 %v452
    %590 = vmatpush.msra.mxu0 %v450
    %591 = vmatpush.msra.mxu0 %v448
    %592 = vmatmul.f32.gmra.mxu0 %v436
    %v593 = vpop.f32.mrf.mxu0
    %v594 = vadd.f32 0.0, %v593
    %595 = vdwg.mxu0
    %596 = vmatpush.msra.mxu0 %v510
    %597 = vmatpush.msra.mxu0 %v508
    %598 = vmatpush.msra.mxu0 %v506
    %599 = vmatpush.msra.mxu0 %v504
    %600 = vmatpush.msra.mxu0 %v502
    %601 = vmatpush.msra.mxu0 %v500
    %602 = vmatpush.msra.mxu0 %v498
    %603 = vmatpush.msra.mxu0 %v496
    %604 = vmatpush.msra.mxu0 %v494
    %605 = vmatpush.msra.mxu0 %v492
    %606 = vmatpush.msra.mxu0 %v490
    %607 = vmatpush.msra.mxu0 %v488
    %608 = vmatpush.msra.mxu0 %v486
    %609 = vmatpush.msra.mxu0 %v484
    %610 = vmatpush.msra.mxu0 %v482
    %611 = vmatpush.msra.mxu0 %v480
    %612 = vmatmul.f32.gmra.mxu0 %v437
    %v613 = vpop.f32.mrf.mxu0
    %v614 = vadd.f32 %v594, %v613
    %615 = vdwg.mxu0
    %616 = vmatpush.msra.mxu0 %v542
    %617 = vmatpush.msra.mxu0 %v540
    %618 = vmatpush.msra.mxu0 %v538
    %619 = vmatpush.msra.mxu0 %v536
    %620 = vmatpush.msra.mxu0 %v534
    %621 = vmatpush.msra.mxu0 %v532
    %622 = vmatpush.msra.mxu0 %v530
    %623 = vmatpush.msra.mxu0 %v528
    %624 = vmatpush.msra.mxu0 %v526
    %625 = vmatpush.msra.mxu0 %v524
    %626 = vmatpush.msra.mxu0 %v522
    %627 = vmatpush.msra.mxu0 %v520
    %628 = vmatpush.msra.mxu0 %v518
    %629 = vmatpush.msra.mxu0 %v516
    %630 = vmatpush.msra.mxu0 %v514
    %631 = vmatpush.msra.mxu0 %v512
    %632 = vmatmul.f32.gmra.mxu0 %v444
    %v633 = vpop.f32.mrf.mxu0
    %v634 = vadd.f32 %v614, %v633
    %635 = vdwg.mxu0
    %636 = vmatpush.msra.mxu0 %v574
    %637 = vmatpush.msra.mxu0 %v572
    %638 = vmatpush.msra.mxu0 %v570
    %639 = vmatpush.msra.mxu0 %v568
    %640 = vmatpush.msra.mxu0 %v566
    %641 = vmatpush.msra.mxu0 %v564
    %642 = vmatpush.msra.mxu0 %v562
    %643 = vmatpush.msra.mxu0 %v560
    %644 = vmatpush.msra.mxu0 %v558
    %645 = vmatpush.msra.mxu0 %v556
    %646 = vmatpush.msra.mxu0 %v554
    %647 = vmatpush.msra.mxu0 %v552
    %648 = vmatpush.msra.mxu0 %v550
    %649 = vmatpush.msra.mxu0 %v548
    %650 = vmatpush.msra.mxu0 %v546
    %651 = vmatpush.msra.mxu0 %v544
    %652 = vmatmul.f32.gmra.mxu0 %v445
    %v653 = vpop.f32.mrf.mxu0
    %v654 = vadd.f32 %v634, %v653
    %655 = vdwg.mxu0
    %656 = vmatpush.msra.mxu0 %v479
    %657 = vmatpush.msra.mxu0 %v477
    %658 = vmatpush.msra.mxu0 %v475
    %659 = vmatpush.msra.mxu0 %v473
    %660 = vmatpush.msra.mxu0 %v471
    %661 = vmatpush.msra.mxu0 %v469
    %662 = vmatpush.msra.mxu0 %v467
    %663 = vmatpush.msra.mxu0 %v465
    %664 = vmatpush.msra.mxu0 %v463
    %665 = vmatpush.msra.mxu0 %v461
    %666 = vmatpush.msra.mxu0 %v459
    %667 = vmatpush.msra.mxu0 %v457
    %668 = vmatpush.msra.mxu0 %v455
    %669 = vmatpush.msra.mxu0 %v453
    %670 = vmatpush.msra.mxu0 %v451
    %671 = vmatpush.msra.mxu0 %v449
    %672 = vmatmul.f32.gmra.mxu0 %v436
    %v673 = vpop.f32.mrf.mxu0
    %v674 = vadd.f32 0.0, %v673
    %675 = vdwg.mxu0
    %676 = vmatpush.msra.mxu0 %v511
    %677 = vmatpush.msra.mxu0 %v509
    %678 = vmatpush.msra.mxu0 %v507
    %679 = vmatpush.msra.mxu0 %v505
    %680 = vmatpush.msra.mxu0 %v503
    %681 = vmatpush.msra.mxu0 %v501
    %682 = vmatpush.msra.mxu0 %v499
    %683 = vmatpush.msra.mxu0 %v497
    %684 = vmatpush.msra.mxu0 %v495
    %685 = vmatpush.msra.mxu0 %v493
    %686 = vmatpush.msra.mxu0 %v491
    %687 = vmatpush.msra.mxu0 %v489
    %688 = vmatpush.msra.mxu0 %v487
    %689 = vmatpush.msra.mxu0 %v485
    %690 = vmatpush.msra.mxu0 %v483
    %691 = vmatpush.msra.mxu0 %v481
    %692 = vmatmul.f32.gmra.mxu0 %v437
    %v693 = vpop.f32.mrf.mxu0
    %v694 = vadd.f32 %v674, %v693
    %695 = vdwg.mxu0
    %696 = vmatpush.msra.mxu0 %v543
    %697 = vmatpush.msra.mxu0 %v541
    %698 = vmatpush.msra.mxu0 %v539
    %699 = vmatpush.msra.mxu0 %v537
    %700 = vmatpush.msra.mxu0 %v535
    %701 = vmatpush.msra.mxu0 %v533
    %702 = vmatpush.msra.mxu0 %v531
    %703 = vmatpush.msra.mxu0 %v529
    %704 = vmatpush.msra.mxu0 %v527
    %705 = vmatpush.msra.mxu0 %v525
    %706 = vmatpush.msra.mxu0 %v523
    %707 = vmatpush.msra.mxu0 %v521
    %708 = vmatpush.msra.mxu0 %v519
    %709 = vmatpush.msra.mxu0 %v517
    %710 = vmatpush.msra.mxu0 %v515
    %711 = vmatpush.msra.mxu0 %v513
    %712 = vmatmul.f32.gmra.mxu0 %v444
    %v713 = vpop.f32.mrf.mxu0
    %v714 = vadd.f32 %v694, %v713
    %715 = vdwg.mxu0
    %716 = vmatpush.msra.mxu0 %v575
    %717 = vmatpush.msra.mxu0 %v573
    %718 = vmatpush.msra.mxu0 %v571
    %719 = vmatpush.msra.mxu0 %v569
    %720 = vmatpush.msra.mxu0 %v567
    %721 = vmatpush.msra.mxu0 %v565
    %722 = vmatpush.msra.mxu0 %v563
    %723 = vmatpush.msra.mxu0 %v561
    %724 = vmatpush.msra.mxu0 %v559
    %725 = vmatpush.msra.mxu0 %v557
    %726 = vmatpush.msra.mxu0 %v555
    %727 = vmatpush.msra.mxu0 %v553
    %728 = vmatpush.msra.mxu0 %v551
    %729 = vmatpush.msra.mxu0 %v549
    %730 = vmatpush.msra.mxu0 %v547
    %731 = vmatpush.msra.mxu0 %v545
    %732 = vmatmul.f32.gmra.mxu0 %v445
    %v733 = vpop.f32.mrf.mxu0
    %v734 = vadd.f32 %v714, %v733
    %735 = vdwg.mxu0
    %v736 = vxor.u32 %v654, 2147483648
    %v737 = vxor.u32 %v734, 2147483648
    %v738 = vmul.f32 %v736, 1.442695
    %v739 = vpow.pop %v738
    %v740 = vmul.f32 %v737, 1.442695
    %v741 = vpow.pop %v740
    %v742 = vadd.f32 %v739, 1.0
    %v743 = vadd.f32 %v741, 1.0
    %v744 = vrcp.pop %v742
    %v745 = vmul.f32 %v742, %v744
    %v746 = vsub.f32 1.0, %v745
    %v747 = vmul.f32 %v744, %v746
    %v748 = vadd.f32 %v744, %v747
    %vm749 = vweird.f32 %v742
    %vm750 = vweird.f32 %v744
    %vm751 = vmor %vm749, %vm750
    %v752 = vsel %vm751, %v744, %v748
    %v753 = vand.u32 2147483647, %v742
    %vm754 = vcmp.eq.f32.partialorder %v753, 8.507059e+37
    %v755 = vand.u32 %v742, 2147483648
    %v756 = vor.u32 1.1754944e-38, %v755
    %v757 = vsel %vm754, %v756, %v752
    %v758 = vmul.f32 1.0, %v757
    %v759 = vrcp.pop %v743
    %v760 = vmul.f32 %v743, %v759
    %v761 = vsub.f32 1.0, %v760
    %v762 = vmul.f32 %v759, %v761
    %v763 = vadd.f32 %v759, %v762
    %vm764 = vweird.f32 %v743
    %vm765 = vweird.f32 %v759
    %vm766 = vmor %vm764, %vm765
    %v767 = vsel %vm766, %v759, %v763
    %v768 = vand.u32 2147483647, %v743
    %vm769 = vcmp.eq.f32.partialorder %v768, 8.507059e+37
    %v770 = vand.u32 %v743, 2147483648
    %v771 = vor.u32 1.1754944e-38, %v770
    %v772 = vsel %vm769, %v771, %v767
    %v773 = vmul.f32 1.0, %v772
    %v776 = vrot.slane %v773, 7
    %vm777 = vcmask 1040384
    %v778 = vsel %vm777, %v758, %v776
    %v779 = vsel %vm165, %v758, %v776
    %v780 = vrot.slane %v779, 1
    %v781 = vperm.slane %v778, 0
    %v782 = vperm.slane %v778, 1
    %v783 = vperm.slane %v780, 0
    %v784 = vperm.slane %v780, 1
    %v789 = vmul.f32 %v333, %v781
    %v790 = vmul.f32 %v334, %v782
    %v791 = vmul.f32 %v335, %v781
    %v792 = vmul.f32 %v336, %v782
    %v793 = vmul.f32 %v337, %v781
    %v794 = vmul.f32 %v338, %v782
    %v795 = vmul.f32 %v339, %v781
    %v796 = vmul.f32 %v340, %v782
    %v797 = vmul.f32 %v341, %v783
    %v798 = vmul.f32 %v342, %v784
    %v799 = vmul.f32 %v343, %v783
    %v800 = vmul.f32 %v344, %v784
    %v801 = vmul.f32 %v345, %v783
    %v802 = vmul.f32 %v346, %v784
    %v803 = vmul.f32 %v347, %v783
    %v804 = vmul.f32 %v348, %v784
    %805 = vst [vmem:[#allocation7] sm:$0xff] %v789
    %806 = vst [vmem:[#allocation7 + $0x8] sm:$0xff] %v790
    %807 = vst [vmem:[#allocation7 + $0x10] sm:$0xff] %v791
    %808 = vst [vmem:[#allocation7 + $0x18] sm:$0xff] %v792
    %809 = vst [vmem:[#allocation7 + $0x20] sm:$0xff] %v793
    %810 = vst [vmem:[#allocation7 + $0x28] sm:$0xff] %v794
    %811 = vst [vmem:[#allocation7 + $0x30] sm:$0xff] %v795
    %812 = vst [vmem:[#allocation7 + $0x38] sm:$0xff] %v796
    %813 = vst [vmem:[#allocation7 + $0x40] sm:$0xff] %v797
    %814 = vst [vmem:[#allocation7 + $0x48] sm:$0xff] %v798
    %815 = vst [vmem:[#allocation7 + $0x50] sm:$0xff] %v799
    %816 = vst [vmem:[#allocation7 + $0x58] sm:$0xff] %v800
    %817 = vst [vmem:[#allocation7 + $0x60] sm:$0xff] %v801
    %818 = vst [vmem:[#allocation7 + $0x68] sm:$0xff] %v802
    %819 = vst [vmem:[#allocation7 + $0x70] sm:$0xff] %v803
    %820 = vst [vmem:[#allocation7 + $0x78] sm:$0xff] %v804
    // Predicated region
    $region34: #{tpu_custom_call.1} parent=1 // pred_check
      _
    $region35: #{tpu_custom_call.1} parent=1 // pred_check_branch
      %822 = sbr.rel (0) target = $region37
    $region36: #{tpu_custom_call.1} parent=1 // pred_region
      %824 = vsyncadd [#allocation4], 0
      %s825 = sshll.u32 [#allocation7], 4
      %s826 = int_to_ptr.vmem [resolvable:$true] %s825
      %s827 = sshll.u32 %s6, 4
      %s828 = int_to_ptr.hbm [resolvable:$true] %s827
      %833 = dma.vmem_to_hbm [thread:$0]  %s826, 2048, %s828, [#allocation4], 256, 256, 16
    $region37: #{tpu_custom_call.1} parent=1 // pred_fallthru
      _
    // Predicated region
    $region38: #{tpu_custom_call.1} parent=1 // pred_check
      _
    $region39: #{tpu_custom_call.1} parent=1 // pred_check_branch
      %835 = sbr.rel (0) target = $region41
    $region40: #{tpu_custom_call.1} parent=1 // pred_region
      %837 = dma.done [#allocation4], 2048
    $region41: #{tpu_custom_call.1} parent=1 // pred_fallthru
      _
    %838 = vsyncpa [#allocation3], 1
    %839 = vsyncpa [#allocation6], 1
    %840 = vsyncpa [#allocation4], 1

</llo_original>
